<compile_context>
chip_gen: v5e
topology: v5e:2x2
jax: 0.10.0
libtpu: 0.0.40
codegen_flags: <defaults>
</compile_context>

<pallas_src>
import functools
import math

import numpy as np
import jax
import jax.numpy as jnp
from jax.experimental import pallas as pl
from jax.experimental.pallas import tpu as pltpu

# --------------------------------------------------------------------------
# Synthetic irreps (deterministic small choice).  (mul, (l, parity))
# --------------------------------------------------------------------------
IRREPS_IN = [(8, (0, 1)), (4, (1, -1))]                   # "8x0e + 4x1o"          -> dim 20
IRREPS_OUT = [(16, (0, 1)), (8, (1, -1)), (4, (2, 1))]    # "16x0e + 8x1o + 4x2e"  -> dim 60
# 4x2e output has no matching input irrep -> exactly zero (output_mask = 0).


def ir_dim(ir):
    return 2 * ir[0] + 1


def irreps_dim(irreps):
    return sum(mul * ir_dim(ir) for mul, ir in irreps)


def irreps_slices(irreps):
    slices, off = [], 0
    for mul, ir in irreps:
        d = mul * ir_dim(ir)
        slices.append(slice(off, off + d))
        off += d
    return slices


D_IN = irreps_dim(IRREPS_IN)      # 20
D_OUT = irreps_dim(IRREPS_OUT)    # 60
SL_IN = irreps_slices(IRREPS_IN)
SL_OUT = irreps_slices(IRREPS_OUT)

# Instruction list: (i_in, i_out) for every matching ir_in == ir_out.
PATHS = [
    (i_in, i_out)
    for i_in, (_, ir_in) in enumerate(IRREPS_IN)
    for i_out, (_, ir_out) in enumerate(IRREPS_OUT)
    if ir_in == ir_out
]

# Active (non-structurally-zero) output columns: only these are computed.
ACTIVE_OUT_IDX = sorted({i_out for _, i_out in PATHS})
ACTIVE_COLS = np.concatenate(
    [np.arange(SL_OUT[i].start, SL_OUT[i].stop) for i in ACTIVE_OUT_IDX]
).astype(np.int32)
N_ACTIVE = int(ACTIVE_COLS.size)                          # 40

# The pad-instead-of-scatter epilogue relies on the active columns being a
# contiguous prefix of the irreps_out layout (true here: 16x0e + 8x1o matched,
# trailing 4x2e unmatched).  Guard it explicitly.
assert np.array_equal(ACTIVE_COLS, np.arange(N_ACTIVE)), (
    "active output columns are not a contiguous prefix; fall back to a scatter"
)

# Slices of each active output block inside the compacted weight.
SL_OUT_ACTIVE = {}
_off = 0
for _i in ACTIVE_OUT_IDX:
    _d = SL_OUT[_i].stop - SL_OUT[_i].start
    SL_OUT_ACTIVE[_i] = slice(_off, _off + _d)
    _off += _d


# --------------------------------------------------------------------------
# Pallas kernel
#   w_ref : (N_ACTIVE, D_IN)    f32, VMEM-resident across the whole grid
#   x_ref : (TILE_B,  D_IN)     f32, natural batch-major feature block
#   o_ref : (N_ACTIVE, TILE_B)  lane-dense output (batch on the 128-lane axis)
# The dot contracts D_IN on BOTH operands so no in-kernel or wrapper-side
# transpose of the feature stream is needed.
# --------------------------------------------------------------------------
def _slow_linear_kernel(w_ref, x_ref, o_ref):
    o_ref[...] = jax.lax.dot_general(
        w_ref[...], x_ref[...],
        dimension_numbers=(((1,), (1,)), ((), ())),   # contract over D_IN
        preferred_element_type=jnp.float32,
    ).astype(o_ref.dtype)


def _choose_tile(batch, max_tile):
    """Lane-aligned batch tile; keep >= 2 grid steps whenever the batch allows
    so the 'parallel' grid axis can shard across v7x's two TensorCores."""
    b_lane = 128 * pl.cdiv(batch, 128)
    tile = max(128, (min(max_tile, b_lane) // 128) * 128)
    if b_lane // tile < 2 and b_lane >= 256:
        tile = max(128, (b_lane // 2 // 128) * 128)
    return tile


@functools.partial(jax.jit, static_argnames=("tile_b", "out_dtype"))
def slow_linear_pallas_compact(features, w_active, *, tile_b=8192,
                               out_dtype=jnp.float32):
    """features: (B, D_IN) f32; w_active: (D_IN, N_ACTIVE) f32.

    Returns the compact transposed result (N_ACTIVE, B): only the active
    output columns, batch on the lane axis.  Zero wrapper-side passes --
    prefer this form downstream when the consumer can take this layout.
    Set out_dtype=jnp.bfloat16 to halve the dominant (output) HBM stream if
    downstream accepts bf16 activations.
    """
    b = features.shape[0]
    tile = _choose_tile(b, tile_b)
    grid = (pl.cdiv(b, tile),)

    # Weight oriented (N_ACTIVE, D_IN) so the kernel contracts the last dim of
    # both operands.  One-time ~3 KiB op; stays f32 (no quantization error).
    w_t = w_active.T.astype(jnp.float32)

    return pl.pallas_call(
        _slow_linear_kernel,
        out_shape=jax.ShapeDtypeStruct((N_ACTIVE, b), out_dtype),
        grid=grid,
        in_specs=[
            # Weight: constant block index -> fetched once, VMEM-resident.
            pl.BlockSpec((N_ACTIVE, D_IN), lambda i: (0, 0)),
            # Features: streamed along the batch axis in natural layout
            # (a ragged last block is padded on read / masked on write).
            pl.BlockSpec((tile, D_IN), lambda i: (i, 0)),
        ],
        out_specs=pl.BlockSpec((N_ACTIVE, tile), lambda i: (0, i)),
        compiler_params=pltpu.CompilerParams(
            # Batch axis is embarrassingly parallel -> v7x megacore sharding
            # (the tile chooser guarantees >=2 steps when the batch allows).
            dimension_semantics=("parallel",),
            # Plenty for tile_b=8192 (~5 MiB double-buffered).  Raise towards
            # 48 MiB only for tile_b in the tens of thousands; keep <= ~48 MiB
            # so the same config still fits v7x's 64 MiB physical VMEM.
            vmem_limit_bytes=32 * 1024 * 1024,
        ),
    )(w_t, features)


@functools.partial(jax.jit, static_argnames=("tile_b", "out_dtype"))
def slow_linear_pallas(features, w_active, *, tile_b=8192,
                       out_dtype=jnp.float32):
    """Full SlowLinear forward: (B, D_IN) -> (B, D_OUT) in irreps_out layout."""
    out_t = slow_linear_pallas_compact(
        features, w_active, tile_b=tile_b, out_dtype=out_dtype)
    # Active columns are a contiguous prefix (asserted at import time), so the
    # structurally-zero 4x2e block is a single trailing zero-pad: exact
    # output_mask semantics with no scatter and no full-width temporary.
    return jnp.pad(out_t.T, ((0, 0), (0, D_OUT - N_ACTIVE)))


# --------------------------------------------------------------------------
# Glue: fold per-path 'uvw' weights into the compact dense matrix
#   W_active[u*dl + m, w*dl + m] = W_path[u, w] / sqrt(mul_in)
# --------------------------------------------------------------------------
def build_dense_weight(path_weights):
    w = jnp.zeros((D_IN, N_ACTIVE), jnp.float32)
    for (i_in, i_out), pw in zip(PATHS, path_weights):
        mul_in, ir = IRREPS_IN[i_in]
        d = ir_dim(ir)
        block = jnp.kron(pw / math.sqrt(mul_in), jnp.eye(d, dtype=jnp.float32))
        w = w.at[SL_IN[i_in], SL_OUT_ACTIVE[i_out]].set(block)
    return w


# Pure-JAX/f32 reference implementing the TensorProduct path-by-path.
def slow_linear_ref(features, path_weights):
    x = features.astype(jnp.float32)
    out = jnp.zeros((features.shape[0], D_OUT), jnp.float32)
    for (i_in, i_out), w in zip(PATHS, path_weights):
        mul_in, ir = IRREPS_IN[i_in]
        mul_out, _ = IRREPS_OUT[i_out]
        d = ir_dim(ir)
        w_eff = (w / math.sqrt(mul_in)).astype(jnp.float32)
        xb = x[:, SL_IN[i_in]].reshape(-1, mul_in, d)
        ob = jnp.einsum("uw,bum->bwm", w_eff, xb,
                        precision=jax.lax.Precision.HIGHEST)
        out = out.at[:, SL_OUT[i_out]].set(ob.reshape(-1, mul_out * d))
    return out


if __name__ == "__main__":
    key = jax.random.PRNGKey(0)
    k_feat, k_w0, k_w1 = jax.random.split(key, 3)

    batch = 256      # small demo batch; _choose_tile -> tile=128, grid=(2,)
    features = jax.random.normal(k_feat, (batch, D_IN), dtype=jnp.float32)

    # Internal weights (shared_weights=True, internal_weights=True):
    # one (mul_in, mul_out) randn block per path.
    path_weights = [
        jax.random.normal(k_w0, (IRREPS_IN[0][0], IRREPS_OUT[0][0]), jnp.float32),  # 0e path
        jax.random.normal(k_w1, (IRREPS_IN[1][0], IRREPS_OUT[1][0]), jnp.float32),  # 1o path
    ]
    w_active = build_dense_weight(path_weights)

    out = slow_linear_pallas(features, w_active)
    out = jax.block_until_ready(out)

    ref = slow_linear_ref(features, path_weights)
    assert out.shape == (batch, D_OUT)
    # Unmatched 4x2e output block must be exactly zero (output_mask semantics).
    assert jnp.all(out[:, SL_OUT[2]] == 0.0)
    # Mosaic's f32 matmul is multi-pass/accurate (typical error ~1e-6 vs the
    # HIGHEST-precision reference); the tolerance is kept wide enough to also
    # cover an MXU precision mode that truncates f32 operands to bf16, while
    # still catching any structural/tiling bug (those are O(1) errors).
    assert jnp.allclose(out, ref, atol=2e-2, rtol=2e-2)

    print("KERNEL_OK")
</pallas_src>

<mosaic_0001>
module attributes {stable_mosaic.version = 11 : i64} {
  func.func @_slow_linear_kernel(%arg0: i32, %arg1: memref<40x20xf32, #tpu.memory_space<vmem>>, %arg2: memref<128x20xf32, #tpu.memory_space<vmem>>, %arg3: memref<40x128xf32, #tpu.memory_space<vmem>>) attributes {dimension_semantics = [#tpu.dimension_semantics<parallel>], iteration_bounds = array<i64: 2>, scalar_prefetch = 0 : i64, scratch_operands = 0 : i64, tpu.core_type = #tpu.core_type<tc>, window_params = [{pipeline_mode = #tpu.pipeline_mode<synchronous>, transform_indices = @transform_0, window_bounds = array<i64: 40, 20>}, {transform_indices = @transform_1, window_bounds = array<i64: 128, 20>}, {transform_indices = @transform_2, window_bounds = array<i64: 40, 128>}]} {
    %c0 = arith.constant 0 : index
    %c0_0 = arith.constant 0 : index
    %0 = vector.load %arg1[%c0, %c0_0] : memref<40x20xf32, #tpu.memory_space<vmem>>, vector<40x20xf32>
    %c0_1 = arith.constant 0 : index
    %c0_2 = arith.constant 0 : index
    %1 = vector.load %arg2[%c0_1, %c0_2] : memref<128x20xf32, #tpu.memory_space<vmem>>, vector<128x20xf32>
    %cst = arith.constant dense<0.000000e+00> : vector<40x128xf32>
    %2 = tpu.matmul %0, %1, %cst {dimension_numbers = #tpu.dot_dimension_numbers<[1], [1], [0], [0], [0, 0, 1, 0], [], []>} : vector<40x20xf32>, vector<128x20xf32>, vector<40x128xf32> -> vector<40x128xf32>
    %c0_3 = arith.constant 0 : index
    %c0_4 = arith.constant 0 : index
    %3 = vector.load %arg3[%c0_3, %c0_4] : memref<40x128xf32, #tpu.memory_space<vmem>>, vector<40x128xf32>
    tpu.vector_store %arg3[%c0_3, %c0_4], %2 {strides = array<i32>} : memref<40x128xf32, #tpu.memory_space<vmem>>, vector<40x128xf32>,
    return
  }
  func.func @transform_0(%arg0: i32) -> (i32, i32) {
    %c0_i32 = arith.constant 0 : i32
    %c0_i32_0 = arith.constant 0 : i32
    %c0_i32_1 = arith.constant 0 : i32
    return %c0_i32, %c0_i32_0 : i32, i32
  }
  func.func @transform_1(%arg0: i32) -> (i32, i32) {
    %c0_i32 = arith.constant 0 : i32
    %c0_i32_0 = arith.constant 0 : i32
    return %arg0, %c0_i32 : i32, i32
  }
  func.func @transform_2(%arg0: i32) -> (i32, i32) {
    %c0_i32 = arith.constant 0 : i32
    %c0_i32_0 = arith.constant 0 : i32
    return %c0_i32, %arg0 : i32, i32
  }
}

</mosaic_0001>

<llo_original>
// kernel: slow_linear_pallas_compact.1
$region0: #{slow_linear_pallas_compact.1}
  #allocation0 [shape = 'u32[]', space=smem, size = 0x4, offset = 0x4, fixed_abs, tag = 'smem constant byte address 0x4 - core index']
  #allocation1 [shape = 'u32[72,128]{1,0:T(1,128)}', space=vmem, size = 0x9000, scoped, tag = 'internal scratch']
  %s0 = inlined_call_operand.vmem [shape: f32[40,20], index: 0, kind: input, shape index: {}]
  %s1 = inlined_call_operand.vmem [shape: f32[256,20], index: 1, kind: input, shape index: {}]
  %s2 = inlined_call_operand.hbm [shape: f32[40,256], index: 2, kind: output, shape index: {}]
  %s3 = sld [smem:[#allocation0]]
  $region41: #{slow_linear_pallas_compact.1} parent=0
    _
  %s5 = ssub.s32 1, %s3
  %s6 = scalar_select 0, %s5, %s3
  $region1: #{slow_linear_pallas_compact.1} parent=0
    #allocation2 [shape = 'u8[40960]{0}', space=vmem, size = 0xa000, scoped, tag = 'output window, operand 0']
    #allocation3 [shape = 's32[2]{0}', space=sflag, size = 0x8, scoped, tag = 'scoped memory for slow_linear_pallas_compact.1']
    %7 = vsyncpa [#allocation3], 0
    %s8 = scalar_lea.sflag [#allocation3], 1
    %9 = vsyncpa %s8, 0
    loop: start=0, step=1, limit=4
    $region2: #{slow_linear_pallas_compact.1} parent=1 // loop_pre_header
      _
    $region3: #{slow_linear_pallas_compact.1} parent=1 // loop_header
      %s11 = sphi 0, %s15
      %p12 = scmp.ge.s32.totalorder %s11, 4
      %s19 = sphi 0, %s19
      %s21 = sphi 0, %s19
      %s22 = sphi 0, %s21
      %s36 = sphi 0, %s22
      %s42 = sphi 0, %s44
      %s45 = sphi 0, %s42
      %s46 = sphi 0, %s45
      %s62 = sphi 0, %s46
      %s68 = sphi 0, %s70
      %s71 = sphi 0, %s68
      %s72 = sphi 0, %s71
      %s88 = sphi 0, %s72
    $region4: #{slow_linear_pallas_compact.1} parent=1 // loop_header_branch
      %14 = sbr.rel (%p12) target = $region8
    $region5: #{slow_linear_pallas_compact.1} parent=1 // loop_body
      %s16 = ssub.s32 %s11, 1
      %s17 = ssub.s32 %s11, 2
      %s18 = sadd.s32 %s11, 1
      %s20 = sadd.s32 %s19, 1
      %p23 = scmp.eq.s32.totalorder %s11, 1
      %p24 = scmp.ne.s32.totalorder %s19, %s21
      %p25 = scmp.eq.s32.totalorder %s11, 0
      %p26 = por %p24, %p25
      %p27 = scmp.ne.s32.totalorder %s19, %s21
      %p28 = scmp.eq.s32.totalorder %s16, 1
      %p29 = por %p27, %p28
      %p30 = scmp.ne.s32.totalorder %s21, %s22
      %p31 = scmp.eq.s32.totalorder %s16, 0
      %p32 = por %p30, %p31
      %p33 = scmp.ne.s32.totalorder %s21, %s22
      %p34 = scmp.eq.s32.totalorder %s17, 1
      %p35 = por %p33, %p34
      %p37 = scmp.ne.s32.totalorder %s22, %s36
      %p38 = scmp.eq.s32.totalorder %s17, 0
      %p39 = por %p37, %p38
      %s40 = ssub.s32 %s11, %s18
      %p41 = scmp.eq.s32.totalorder %s40, 0
      %s43 = sadd.s32 %s42, 1
      %s44 = scalar_select %p41, %s42, %s43
      %p47 = pneg %p41
      %p48 = scmp.eq.s32.totalorder %s11, 1
      %p49 = por %p47, %p48
      %p50 = scmp.ne.s32.totalorder %s42, %s45
      %p51 = scmp.eq.s32.totalorder %s11, 0
      %p52 = por %p50, %p51
      %p53 = scmp.ne.s32.totalorder %s42, %s45
      %p54 = scmp.eq.s32.totalorder %s16, 1
      %p55 = por %p53, %p54
      %p56 = scmp.ne.s32.totalorder %s45, %s46
      %p57 = scmp.eq.s32.totalorder %s16, 0
      %p58 = por %p56, %p57
      %p59 = scmp.ne.s32.totalorder %s45, %s46
      %p60 = scmp.eq.s32.totalorder %s17, 1
      %p61 = por %p59, %p60
      %p63 = scmp.ne.s32.totalorder %s46, %s62
      %p64 = scmp.eq.s32.totalorder %s17, 0
      %p65 = por %p63, %p64
      %s66 = ssub.s32 %s11, %s18
      %p67 = scmp.eq.s32.totalorder %s66, 0
      %s69 = sadd.s32 %s68, 1
      %s70 = scalar_select %p67, %s68, %s69
      %p73 = pneg %p67
      %p74 = scmp.eq.s32.totalorder %s11, 1
      %p75 = por %p73, %p74
      %p76 = scmp.ne.s32.totalorder %s68, %s71
      %p77 = scmp.eq.s32.totalorder %s11, 0
      %p78 = por %p76, %p77
      %p79 = scmp.ne.s32.totalorder %s68, %s71
      %p80 = scmp.eq.s32.totalorder %s16, 1
      %p81 = por %p79, %p80
      %p82 = scmp.ne.s32.totalorder %s71, %s72
      %p83 = scmp.eq.s32.totalorder %s16, 0
      %p84 = por %p82, %p83
      %p85 = scmp.ne.s32.totalorder %s71, %s72
      %p86 = scmp.eq.s32.totalorder %s17, 1
      %p87 = por %p85, %p86
      %p89 = scmp.ne.s32.totalorder %s72, %s88
      %p90 = scmp.eq.s32.totalorder %s17, 0
      %p91 = por %p89, %p90
      %p92 = scmp.le.s32.totalorder 1, %s11
      %p93 = scmp.lt.s32.totalorder %s11, 3
      %p94 = pnand %p92, %p93
      %p95 = pneg %p94
      // Predicated region
      $region9: #{slow_linear_pallas_compact.1} parent=5 // pred_check
        _
      $region10: #{slow_linear_pallas_compact.1} parent=5 // pred_check_branch
        %97 = sbr.rel (%p94) target = $region12
      $region11: #{slow_linear_pallas_compact.1} parent=5 // pred_region
        %s98 = ssub.s32 %s11, 1
        // Predicated region
        $region13: #{slow_linear_pallas_compact.1} parent=11 // pred_check
          %p99 = pneg %p32
        $region14: #{slow_linear_pallas_compact.1} parent=11 // pred_check_branch
          %101 = sbr.rel (%p99) target = $region16
        $region15: #{slow_linear_pallas_compact.1} parent=11 // pred_region
          _
        $region16: #{slow_linear_pallas_compact.1} parent=11 // pred_fallthru
          _
      $region12: #{slow_linear_pallas_compact.1} parent=5 // pred_fallthru
        _
      %p102 = scmp.lt.s32.totalorder %s11, 2
      // Predicated region
      $region17: #{slow_linear_pallas_compact.1} parent=5 // pred_check
        %p103 = pneg %p102
      $region18: #{slow_linear_pallas_compact.1} parent=5 // pred_check_branch
        %105 = sbr.rel (%p103) target = $region20
      $region19: #{slow_linear_pallas_compact.1} parent=5 // pred_region
        // Predicated region
        $region21: #{slow_linear_pallas_compact.1} parent=19 // pred_check
          %p106 = pneg %p52
        $region22: #{slow_linear_pallas_compact.1} parent=19 // pred_check_branch
          %108 = sbr.rel (%p106) target = $region24
        $region23: #{slow_linear_pallas_compact.1} parent=19 // pred_region
          %s109 = smul.u32 16, %s11
          %p110 = scmp.lt.s32.totalorder %s109, 31
          %s111 = scalar_select %p110, %s109, 31
          %s112 = smul.addr %s111, 8
          %s113 = scalar_lea.vmem %s1, %s112
          %s114 = smul.u32 16, %s11
        $region24: #{slow_linear_pallas_compact.1} parent=19 // pred_fallthru
          _
      $region20: #{slow_linear_pallas_compact.1} parent=5 // pred_fallthru
        _
      %p115 = scmp.le.s32.totalorder 1, %s11
      %p116 = scmp.lt.s32.totalorder %s11, 3
      %p117 = pnand %p115, %p116
      %p118 = pneg %p117
      // Predicated region
      $region25: #{slow_linear_pallas_compact.1} parent=5 // pred_check
        _
      $region26: #{slow_linear_pallas_compact.1} parent=5 // pred_check_branch
        %120 = sbr.rel (%p117) target = $region28
      $region27: #{slow_linear_pallas_compact.1} parent=5 // pred_region
        %s121 = ssub.s32 %s11, 1
        %p122 = pneg %p32
        %p123 = pneg %p29
        %s124 = smul.u32 16, %s16
        %p125 = scmp.lt.s32.totalorder %s124, 31
        %s126 = scalar_select %p125, %s124, 31
        %s127 = smul.addr %s126, 8
        %s128 = scalar_lea.vmem %s1, %s127
        %p129 = pneg %p58
        %p130 = pneg %p55
        %p131 = pneg %p84
        %p132 = pneg %p81
        %s133 = sand.u32 %s71, 1
        %s134 = scalar_lea.sflag [#allocation3], %s133
        %s135 = sand.u32 %s71, 1
        %s136 = smul.addr %s135, 40
        %s137 = scalar_lea.vmem [#allocation2], %s136
        %s138 = smul.u32 16, %s16
        %p139 = scmp.lt.s32.totalorder %s138, 31
        %s140 = scalar_select %p139, %s138, 31
        %s141 = smul.addr %s140, 8
        %s142 = scalar_lea.vmem %s1, %s141
        %s143 = smul.u32 16, %s16
        %v144 = vld [vmem:[%s0] sm:$0xff]
        %v145 = vld [vmem:[%s0 + $0x8] sm:$0xff]
        %v146 = vld [vmem:[%s0 + $0x10] sm:$0xff]
        %v147 = vld [vmem:[%s0 + $0x18] sm:$0xff]
        %v148 = vld [vmem:[%s0 + $0x20] sm:$0xff]
        %v149 = vld [vmem:[%s142] sm:$0xff]
        %v150 = vld [vmem:[%s142 + $0x8] sm:$0xff]
        %v151 = vld [vmem:[%s142 + $0x10] sm:$0xff]
        %v152 = vld [vmem:[%s142 + $0x18] sm:$0xff]
        %v153 = vld [vmem:[%s142 + $0x20] sm:$0xff]
        %v154 = vld [vmem:[%s142 + $0x28] sm:$0xff]
        %v155 = vld [vmem:[%s142 + $0x30] sm:$0xff]
        %v156 = vld [vmem:[%s142 + $0x38] sm:$0xff]
        %v157 = vld [vmem:[%s142 + $0x40] sm:$0xff]
        %v158 = vld [vmem:[%s142 + $0x48] sm:$0xff]
        %v159 = vld [vmem:[%s142 + $0x50] sm:$0xff]
        %v160 = vld [vmem:[%s142 + $0x58] sm:$0xff]
        %v161 = vld [vmem:[%s142 + $0x60] sm:$0xff]
        %v162 = vld [vmem:[%s142 + $0x68] sm:$0xff]
        %v163 = vld [vmem:[%s142 + $0x70] sm:$0xff]
        %v164 = vld [vmem:[%s142 + $0x78] sm:$0xff]
        %vm165 = vcmask 162816
        %v167 = vsel %vm165, %v144, 0
        %v170 = vsel %vm165, %v145, 0
        %v173 = vsel %vm165, %v146, 0
        %v176 = vsel %vm165, %v147, 0
        %v179 = vsel %vm165, %v148, 0
        %v182 = vsel %vm165, %v149, 0
        %v185 = vsel %vm165, %v150, 0
        %v188 = vsel %vm165, %v151, 0
        %v191 = vsel %vm165, %v152, 0
        %v194 = vsel %vm165, %v153, 0
        %v197 = vsel %vm165, %v154, 0
        %v200 = vsel %vm165, %v155, 0
        %v203 = vsel %vm165, %v156, 0
        %v206 = vsel %vm165, %v157, 0
        %v209 = vsel %vm165, %v158, 0
        %v212 = vsel %vm165, %v159, 0
        %v215 = vsel %vm165, %v160, 0
        %v218 = vsel %vm165, %v161, 0
        %v221 = vsel %vm165, %v162, 0
        %v224 = vsel %vm165, %v163, 0
        %v227 = vsel %vm165, %v164, 0
        %229 = vmatpush.xpose.msra.mxu0 %v227
        %230 = vmatpush.xpose.msra.mxu0 %v224
        %231 = vmatpush.xpose.msra.mxu0 %v221
        %232 = vmatpush.xpose.msra.mxu0 %v218
        %233 = vmatpush.xpose.msra.mxu0 %v215
        %234 = vmatpush.xpose.msra.mxu0 %v212
        %235 = vmatpush.xpose.msra.mxu0 %v209
        %236 = vmatpush.xpose.msra.mxu0 %v206
        %237 = vmatpush.xpose.msra.mxu0 %v203
        %238 = vmatpush.xpose.msra.mxu0 %v200
        %239 = vmatpush.xpose.msra.mxu0 %v197
        %240 = vmatpush.xpose.msra.mxu0 %v194
        %241 = vmatpush.xpose.msra.mxu0 %v191
        %242 = vmatpush.xpose.msra.mxu0 %v188
        %243 = vmatpush.xpose.msra.mxu0 %v185
        %244 = vmatpush.xpose.msra.mxu0 %v182
        %245 = vmatmul.f32.gmra.mxu0 %v167
        %v246 = vpop.f32.mrf.mxu0
        %v247 = vadd.f32 0.0, %v246
        %248 = vmatmul.f32.gmra.mxu0 %v170
        %v249 = vpop.f32.mrf.mxu0
        %v250 = vadd.f32 0.0, %v249
        %251 = vmatmul.f32.gmra.mxu0 %v173
        %v252 = vpop.f32.mrf.mxu0
        %v253 = vadd.f32 0.0, %v252
        %254 = vmatmul.f32.gmra.mxu0 %v176
        %v255 = vpop.f32.mrf.mxu0
        %v256 = vadd.f32 0.0, %v255
        %257 = vmatmul.f32.gmra.mxu0 %v179
        %v258 = vpop.f32.mrf.mxu0
        %v259 = vadd.f32 0.0, %v258
        %260 = vdwg.mxu0
        %261 = vst [vmem:[%s137] sm:$0xff] %v247
        %262 = vst [vmem:[%s137 + $0x8] sm:$0xff] %v250
        %263 = vst [vmem:[%s137 + $0x10] sm:$0xff] %v253
        %264 = vst [vmem:[%s137 + $0x18] sm:$0xff] %v256
        %265 = vst [vmem:[%s137 + $0x20] sm:$0xff] %v259
        %s266 = sand.u32 %s71, 1
        %s267 = scalar_lea.sflag [#allocation3], %s266
        %s268 = sand.u32 %s71, 1
        %s269 = smul.addr %s268, 40
        %s270 = scalar_lea.vmem [#allocation2], %s269
        // Predicated region
        $region29: #{slow_linear_pallas_compact.1} parent=27 // pred_check
          %p271 = pneg %p81
        $region30: #{slow_linear_pallas_compact.1} parent=27 // pred_check_branch
          %273 = sbr.rel (%p271) target = $region32
        $region31: #{slow_linear_pallas_compact.1} parent=27 // pred_region
          %275 = vsyncadd %s267, 0
          %s276 = smul.addr %s16, 8
          %s277 = scalar_lea.hbm %s2, %s276
          %s278 = sshll.u32 %s270, 4
          %s279 = int_to_ptr.vmem [resolvable:$true] %s278
          %s280 = sshll.u32 %s277, 4
          %s281 = int_to_ptr.hbm [resolvable:$true] %s280
          %286 = dma.vmem_to_hbm [thread:$0]  %s279, 640, %s281, %s267, 128, 256, 8
        $region32: #{slow_linear_pallas_compact.1} parent=27 // pred_fallthru
          _
      $region28: #{slow_linear_pallas_compact.1} parent=5 // pred_fallthru
        _
      %p287 = scmp.le.s32.totalorder 2, %s11
      // Predicated region
      $region33: #{slow_linear_pallas_compact.1} parent=5 // pred_check
        %p288 = pneg %p287
      $region34: #{slow_linear_pallas_compact.1} parent=5 // pred_check_branch
        %290 = sbr.rel (%p288) target = $region36
      $region35: #{slow_linear_pallas_compact.1} parent=5 // pred_region
        %s291 = ssub.s32 %s11, 2
        // Predicated region
        $region37: #{slow_linear_pallas_compact.1} parent=35 // pred_check
          %p292 = pneg %p87
        $region38: #{slow_linear_pallas_compact.1} parent=35 // pred_check_branch
          %294 = sbr.rel (%p292) target = $region40
        $region39: #{slow_linear_pallas_compact.1} parent=35 // pred_region
          %s295 = sand.u32 %s72, 1
          %s296 = scalar_lea.sflag [#allocation3], %s295
          %s297 = sand.u32 %s72, 1
          %s298 = smul.addr %s297, 40
          %s299 = scalar_lea.vmem [#allocation2], %s298
          %301 = dma.done %s296, 640
        $region40: #{slow_linear_pallas_compact.1} parent=35 // pred_fallthru
          _
      $region36: #{slow_linear_pallas_compact.1} parent=5 // pred_fallthru
        _
    $region6: #{slow_linear_pallas_compact.1} parent=1 // loop_footer
      %s15 = sadd.s32 1, %s11
    $region7: #{slow_linear_pallas_compact.1} parent=1 // loop_footer_branch
      %10 = sbr.rel target = $region3
    $region8: #{slow_linear_pallas_compact.1} parent=1 // loop_exit
      _
    %302 = vsyncpa [#allocation3], 1
    %s303 = scalar_lea.sflag [#allocation3], 1
    %304 = vsyncpa %s303, 1

</llo_original>
